<compile_context>
chip_gen: v5e
topology: v5e:2x2
jax: 0.10.0
libtpu: 0.0.40
codegen_flags: <defaults>
</compile_context>

<pallas_src>
import functools

import jax
import jax.numpy as jnp
from jax.experimental import pallas as pl
from jax.experimental.pallas import tpu as pltpu


def _round_up(x, m):
    return ((x + m - 1) // m) * m


def _default_tile_scenes(B, A, P):
    """Prefer >= 2 parallel grid steps (v7x has 2 TensorCores per chip) when
    the resulting per-tile blocks stay 8-sublane aligned; otherwise one tile."""
    if B % 2 == 0:
        tb = B // 2
        if (tb * P) % 8 == 0 and (tb * A) % 8 == 0:
            return tb
    return B


# ----------------------------------------------------------------------------
# Fused Pallas kernel: map encoder + agents decoder for one tile of scenes
# ----------------------------------------------------------------------------
def _scene_generator_kernel(map_feat_ref, noise_ref, exists_ref,
                            w1_ref, w2_ref, wm_ref, wn_ref, wd2_ref, wd3_ref,
                            biases_ref, out_ref,
                            *, tile_scenes, points_per_scene, agents):
    """One grid step == `tile_scenes` whole scenes.

    map_feat_ref : (TB*P, Dp_pad)   noise_ref : (TB*A, Dn)
    exists_ref   : (TB*A, 1)        biases_ref: (8, >=128) packed bias rows
    out_ref      : (TB*A, Df_pad)
    """
    TB, P, A = tile_scenes, points_per_scene, agents
    H1 = w1_ref.shape[1]
    Dl = w2_ref.shape[1]
    Hd = wm_ref.shape[1]
    Df_pad = wd3_ref.shape[1]

    # Packed biases: one DMA, sliced from lane/sublane offset 0 (no relayout).
    b_all = biases_ref[...]                      # (8, >=128) f32
    b1  = b_all[0:1, :H1]
    b2  = b_all[1:2, :Dl]
    bd1 = b_all[2:3, :Hd]                        # already includes folded b3 @ wm
    bd2 = b_all[3:4, :Hd]
    bd3 = b_all[4:5, :Df_pad]

    # ---- MapEncoder: point MLP (batched over all scenes in the tile) ----
    x = map_feat_ref[...]                                            # (TB*P, Dp_pad) f32
    h = jnp.dot(x.astype(jnp.bfloat16), w1_ref[...],
                preferred_element_type=jnp.float32) + b1
    h = jnp.maximum(h, 0.0)                                          # (TB*P, H1)
    h = jnp.dot(h.astype(jnp.bfloat16), w2_ref[...],
                preferred_element_type=jnp.float32) + b2
    h = jnp.maximum(h, 0.0)                                          # (TB*P, Dl)

    # Per-scene max-pool over the P points: single reshape-reduce (constant
    # XLU cost per tile, no TB-way Python unroll).
    pooled = jnp.max(h.reshape(TB, P, Dl), axis=1)                   # (TB, Dl)

    # ---- AgentsDecoder ----
    # Map head + first decoder layer, folded at init:
    #   lat_proj = (pooled @ w3 + b3) @ wm + bd1 == pooled @ wm_eff + bd1_eff
    lat_proj = jnp.dot(pooled.astype(jnp.bfloat16), wm_ref[...],
                       preferred_element_type=jnp.float32) + bd1     # (TB, Hd)

    # Scatter per-scene rows to per-agent rows with an in-kernel bf16 one-hot
    # selector (never DMA'd; exact since values are 0/1 with one term per row).
    ri = jax.lax.broadcasted_iota(jnp.int32, (TB * A, TB), 0)
    ci = jax.lax.broadcasted_iota(jnp.int32, (TB * A, TB), 1)
    onehot = ((ri >= ci * A) & (ri < (ci + 1) * A)).astype(jnp.bfloat16)
    lat_bias = jnp.dot(onehot, lat_proj.astype(jnp.bfloat16),
                       preferred_element_type=jnp.float32)           # (TB*A, Hd)

    # concat([map_latent, noise]) @ W1 == lat @ Wm + noise @ Wn (+ bias).
    h2 = jnp.dot(noise_ref[...].astype(jnp.bfloat16), wn_ref[...],
                 preferred_element_type=jnp.float32) + lat_bias
    h2 = jnp.maximum(h2, 0.0)                                        # (TB*A, Hd)
    h3 = jnp.dot(h2.astype(jnp.bfloat16), wd2_ref[...],
                 preferred_element_type=jnp.float32) + bd2
    h3 = jnp.maximum(h3, 0.0)                                        # (TB*A, Hd)
    feat = jnp.dot(h3.astype(jnp.bfloat16), wd3_ref[...],
                   preferred_element_type=jnp.float32) + bd3         # (TB*A, Df_pad)

    # Mask non-existing agent slots (exact zeros); lane-dense unmasked store.
    out_ref[...] = feat * exists_ref[...]


# ----------------------------------------------------------------------------
# pallas_call wrapper
# ----------------------------------------------------------------------------
def scene_generator_fused(map_feat_flat, noise_flat, exists_flat,
                          weights, biases,
                          *, batch, agents, points, df_pad, tile_scenes=None):
    B, A, P = batch, agents, points
    TB = _default_tile_scenes(B, A, P) if tile_scenes is None else tile_scenes
    assert B % TB == 0, "batch must be divisible by the scene tile"
    n_tiles = B // TB
    if n_tiles > 1:
        # when actually tiling, keep block sublane dims 8-aligned
        assert (TB * P) % 8 == 0 and (TB * A) % 8 == 0

    Dp_pad = map_feat_flat.shape[-1]
    Dn = noise_flat.shape[-1]

    kernel = functools.partial(_scene_generator_kernel,
                               tile_scenes=TB, points_per_scene=P, agents=A)

    out_flat = pl.pallas_call(
        kernel,
        out_shape=jax.ShapeDtypeStruct((B * A, df_pad), jnp.float32),
        grid=(n_tiles,),
        in_specs=[
            pl.BlockSpec((TB * P, Dp_pad), lambda i: (i, 0)),
            pl.BlockSpec((TB * A, Dn), lambda i: (i, 0)),
            pl.BlockSpec((TB * A, 1), lambda i: (i, 0)),
        ] + [pl.BlockSpec(w.shape, lambda i: (0, 0)) for w in weights]
          + [pl.BlockSpec(biases.shape, lambda i: (0, 0))],
        out_specs=pl.BlockSpec((TB * A, df_pad), lambda i: (i, 0)),
        compiler_params=pltpu.CompilerParams(dimension_semantics=("parallel",)),
    )(map_feat_flat, noise_flat, exists_flat, *weights, biases)
    return out_flat


# ----------------------------------------------------------------------------
# SceneGenerator (JAX-side module)
# ----------------------------------------------------------------------------
class SceneGenerator:
    def __init__(self, *, max_num_agents, dim_latent_map, dim_agent_feat_vec,
                 dim_agent_noise, latent_noise_trunc_stds, dim_map_point_feat,
                 hidden_map=64, hidden_dec=64, seed=0):
        self.max_num_agents = max_num_agents
        self.dim_latent_map = dim_latent_map
        self.dim_agent_feat_vec = dim_agent_feat_vec
        self.dim_agent_noise = dim_agent_noise
        self.latent_noise_trunc_stds = latent_noise_trunc_stds
        self.dim_map_point_feat = dim_map_point_feat
        # Padded dims: first contraction K -> multiple of 8; output feature dim -> 128
        # so the final store is an unmasked lane-dense vst (small latency-bound B).
        self.dim_map_point_feat_pad = _round_up(max(dim_map_point_feat, 8), 8)
        self.dim_agent_feat_pad = _round_up(dim_agent_feat_vec, 128)

        k = jax.random.PRNGKey(seed)
        ks = jax.random.split(k, 8)

        def init(key, shape, fan_in):
            return (jax.random.normal(key, shape, jnp.float32)
                    / jnp.sqrt(jnp.float32(fan_in)))

        Dp, Dp_pad = dim_map_point_feat, self.dim_map_point_feat_pad
        Dl, Dn = dim_latent_map, dim_agent_noise
        Df, Df_pad = dim_agent_feat_vec, self.dim_agent_feat_pad
        Hd, H1 = hidden_dec, hidden_map
        assert max(H1, Dl, Hd) <= max(128, Df_pad)

        # ---- raw (f32) parameters ----
        # MapEncoder: point-MLP -> max-pool -> linear head.  Padded w1 rows are
        # zero (padded input feature columns are zero too -> semantics unchanged).
        w1 = jnp.zeros((Dp_pad, H1), jnp.float32)
        w1 = w1.at[:Dp].set(init(ks[0], (Dp, H1), Dp))
        b1 = jnp.zeros((H1,), jnp.float32)
        w2 = init(ks[1], (H1, Dl), H1)
        b2 = jnp.zeros((Dl,), jnp.float32)
        w3 = init(ks[2], (Dl, Dl), Dl)
        b3 = jnp.zeros((Dl,), jnp.float32)
        # AgentsDecoder: concat(map_latent, noise)@W1 == lat@Wm + noise@Wn.
        wm = init(ks[3], (Dl, Hd), Dl + Dn)
        wn = init(ks[4], (Dn, Hd), Dl + Dn)
        bd1 = jnp.zeros((Hd,), jnp.float32)
        wd2 = init(ks[6], (Hd, Hd), Hd)
        bd2 = jnp.zeros((Hd,), jnp.float32)
        # wd3/bd3 zero-padded from Df to Df_pad columns -> padded output lanes are 0.
        wd3 = jnp.zeros((Hd, Df_pad), jnp.float32)
        wd3 = wd3.at[:, :Df].set(init(ks[5], (Hd, Df), Hd))
        bd3 = jnp.zeros((Df_pad,), jnp.float32)

        # ---- fold the MapEncoder linear head into the decoder's first layer ----
        # lat_proj = (pooled @ w3 + b3) @ wm + bd1 == pooled @ wm_eff + bd1_eff
        wm_eff = w3 @ wm                              # (Dl, Hd), exact fold in f32
        bd1_eff = b3 @ wm + bd1                       # (Hd,)

        # MXU operands in bf16; biases packed into one f32 slab (single DMA).
        self.weights = (
            w1.astype(jnp.bfloat16),
            w2.astype(jnp.bfloat16),
            wm_eff.astype(jnp.bfloat16),
            wn.astype(jnp.bfloat16),
            wd2.astype(jnp.bfloat16),
            wd3.astype(jnp.bfloat16),
        )
        bias_lanes = max(128, Df_pad)
        biases = jnp.zeros((8, bias_lanes), jnp.float32)
        biases = biases.at[0, :H1].set(b1)
        biases = biases.at[1, :Dl].set(b2)
        biases = biases.at[2, :Hd].set(bd1_eff)
        biases = biases.at[3, :Hd].set(bd2)
        biases = biases.at[4, :Df_pad].set(bd3)
        self.biases = biases

    def generate_latent_noise(self, rng, batch_size, n_agents_per_scene):
        # TODO(synk): torch's per-scene in-place trunc_normal_ loop is replaced by a
        # vectorized truncated-normal draw + per-scene mask (same distribution on
        # live rows for the symmetric unit-std case used here).
        t = jnp.float32(self.latent_noise_trunc_stds)
        noise = jax.random.truncated_normal(
            rng, -t, t, (batch_size, self.max_num_agents, self.dim_agent_noise),
            dtype=jnp.float32)
        slot = jnp.arange(self.max_num_agents)[None, :]              # (1, A)
        mask = (slot < n_agents_per_scene[:, None]).astype(jnp.float32)
        return noise * mask[:, :, None]                              # zeros past n_agents

    def forward(self, conditioning, rng):
        map_feat = conditioning["map_feat"]                          # [B, P, Dp]
        n_agents_per_scene = conditioning["n_agents_in_scene"]       # [B] int32
        agents_exists = conditioning["agents_exists"]                # [B, A] bool
        B, P, Dp = map_feat.shape
        A = self.max_num_agents
        Df, Df_pad = self.dim_agent_feat_vec, self.dim_agent_feat_pad
        Dp_pad = self.dim_map_point_feat_pad

        # Flatten batch into the matmul M dimension; zero-pad the point-feature dim.
        map_feat_p = jnp.pad(map_feat.astype(jnp.float32),
                             ((0, 0), (0, 0), (0, Dp_pad - Dp)))
        map_feat_flat = map_feat_p.reshape(B * P, Dp_pad)

        latent_noise = self.generate_latent_noise(rng, B, n_agents_per_scene)
        noise_flat = latent_noise.reshape(B * A, self.dim_agent_noise)
        exists_flat = agents_exists.astype(jnp.float32).reshape(B * A, 1)

        out_flat = scene_generator_fused(
            map_feat_flat, noise_flat, exists_flat,
            self.weights, self.biases,
            batch=B, agents=A, points=P, df_pad=Df_pad)              # [B*A, Df_pad]

        # Un-pad / un-flatten in plain JAX.
        return out_flat.reshape(B, A, Df_pad)[:, :, :Df]             # [B, A, Df]


# ----------------------------------------------------------------------------
# Demo
# ----------------------------------------------------------------------------
if __name__ == "__main__":
    B = 2            # batch (scenes)
    P = 16           # map points per scene
    Dp = 4           # features per map point
    A = 8            # max_num_agents
    Dn = 16          # dim_agent_noise
    Dl = 32          # dim_latent_map
    Df = 7           # dim_agent_feat_vec (x, y, cos, sin, len, width, speed)

    gen = SceneGenerator(max_num_agents=A, dim_latent_map=Dl,
                         dim_agent_feat_vec=Df, dim_agent_noise=Dn,
                         latent_noise_trunc_stds=2.0,
                         dim_map_point_feat=Dp, seed=0)

    key = jax.random.PRNGKey(0)
    k_map, k_nag, k_noise = jax.random.split(key, 3)

    map_feat = jax.random.normal(k_map, (B, P, Dp), jnp.float32)
    n_agents_in_scene = jnp.array([5, 3], jnp.int32)                 # per-scene agent counts
    agents_exists = (jnp.arange(A)[None, :] < n_agents_in_scene[:, None])

    conditioning = {
        "map_feat": map_feat,
        "n_agents_in_scene": n_agents_in_scene,
        "agents_exists": agents_exists,
    }

    agents_feat_vecs = gen.forward(conditioning, k_noise)
    agents_feat_vecs = jax.block_until_ready(agents_feat_vecs)
    assert agents_feat_vecs.shape == (B, A, Df)
    assert bool(jnp.all(jnp.isfinite(agents_feat_vecs)))
    # rows for non-existing agent slots must be exactly zero
    assert bool(jnp.all(jnp.where(agents_exists[:, :, None], True,
                                  agents_feat_vecs == 0.0)))
    print("KERNEL_OK")
</pallas_src>

<mosaic_0001>
module attributes {stable_mosaic.version = 11 : i64} {
  func.func @_scene_generator_kernel(%arg0: i32, %arg1: memref<16x8xf32, #tpu.memory_space<vmem>>, %arg2: memref<8x16xf32, #tpu.memory_space<vmem>>, %arg3: memref<8x1xf32, #tpu.memory_space<vmem>>, %arg4: memref<8x64xbf16, #tpu.memory_space<vmem>>, %arg5: memref<64x32xbf16, #tpu.memory_space<vmem>>, %arg6: memref<32x64xbf16, #tpu.memory_space<vmem>>, %arg7: memref<16x64xbf16, #tpu.memory_space<vmem>>, %arg8: memref<64x64xbf16, #tpu.memory_space<vmem>>, %arg9: memref<64x128xbf16, #tpu.memory_space<vmem>>, %arg10: memref<8x128xf32, #tpu.memory_space<vmem>>, %arg11: memref<8x128xf32, #tpu.memory_space<vmem>>) attributes {dimension_semantics = [#tpu.dimension_semantics<parallel>], iteration_bounds = array<i64: 2>, scalar_prefetch = 0 : i64, scratch_operands = 0 : i64, tpu.core_type = #tpu.core_type<tc>, window_params = [{transform_indices = @transform_0, window_bounds = array<i64: 16, 8>}, {transform_indices = @transform_1, window_bounds = array<i64: 8, 16>}, {transform_indices = @transform_2, window_bounds = array<i64: 8, 1>}, {pipeline_mode = #tpu.pipeline_mode<synchronous>, transform_indices = @transform_3, window_bounds = array<i64: 8, 64>}, {pipeline_mode = #tpu.pipeline_mode<synchronous>, transform_indices = @transform_4, window_bounds = array<i64: 64, 32>}, {pipeline_mode = #tpu.pipeline_mode<synchronous>, transform_indices = @transform_5, window_bounds = array<i64: 32, 64>}, {pipeline_mode = #tpu.pipeline_mode<synchronous>, transform_indices = @transform_6, window_bounds = array<i64: 16, 64>}, {pipeline_mode = #tpu.pipeline_mode<synchronous>, transform_indices = @transform_7, window_bounds = array<i64: 64, 64>}, {pipeline_mode = #tpu.pipeline_mode<synchronous>, transform_indices = @transform_8, window_bounds = array<i64: 64, 128>}, {pipeline_mode = #tpu.pipeline_mode<synchronous>, transform_indices = @transform_9, window_bounds = array<i64: 8, 128>}, {transform_indices = @transform_10, window_bounds = array<i64: 8, 128>}]} {
    %c0 = arith.constant 0 : index
    %c0_0 = arith.constant 0 : index
    %0 = vector.load %arg10[%c0, %c0_0] : memref<8x128xf32, #tpu.memory_space<vmem>>, vector<8x128xf32>
    %1 = vector.extract_strided_slice %0 {offsets = [0, 0], sizes = [1, 64], strides = [1, 1]} : vector<8x128xf32> to vector<1x64xf32>
    %2 = vector.extract_strided_slice %0 {offsets = [1, 0], sizes = [1, 32], strides = [1, 1]} : vector<8x128xf32> to vector<1x32xf32>
    %3 = vector.extract_strided_slice %0 {offsets = [2, 0], sizes = [1, 64], strides = [1, 1]} : vector<8x128xf32> to vector<1x64xf32>
    %4 = vector.extract_strided_slice %0 {offsets = [3, 0], sizes = [1, 64], strides = [1, 1]} : vector<8x128xf32> to vector<1x64xf32>
    %5 = vector.extract_strided_slice %0 {offsets = [4, 0], sizes = [1, 128], strides = [1, 1]} : vector<8x128xf32> to vector<1x128xf32>
    %c0_1 = arith.constant 0 : index
    %c0_2 = arith.constant 0 : index
    %6 = vector.load %arg1[%c0_1, %c0_2] : memref<16x8xf32, #tpu.memory_space<vmem>>, vector<16x8xf32>
    %7 = arith.truncf %6 : vector<16x8xf32> to vector<16x8xbf16>
    %c0_3 = arith.constant 0 : index
    %c0_4 = arith.constant 0 : index
    %8 = vector.load %arg4[%c0_3, %c0_4] : memref<8x64xbf16, #tpu.memory_space<vmem>>, vector<8x64xbf16>
    %cst = arith.constant dense<0.000000e+00> : vector<16x64xf32>
    %9 = tpu.matmul %7, %8, %cst {dimension_numbers = #tpu.dot_dimension_numbers<[1], [0], [0], [1], [0, 0, 1, 1], [], []>} : vector<16x8xbf16>, vector<8x64xbf16>, vector<16x64xf32> -> vector<16x64xf32>
    %10 = vector.broadcast %1 : vector<1x64xf32> to vector<16x64xf32>
    %11 = arith.addf %9, %10 : vector<16x64xf32>
    %cst_5 = arith.constant 0.000000e+00 : f32
    %12 = vector.broadcast %cst_5 : f32 to vector<16x64xf32>
    %13 = arith.maximumf %11, %12 : vector<16x64xf32>
    %14 = arith.truncf %13 : vector<16x64xf32> to vector<16x64xbf16>
    %c0_6 = arith.constant 0 : index
    %c0_7 = arith.constant 0 : index
    %15 = vector.load %arg5[%c0_6, %c0_7] : memref<64x32xbf16, #tpu.memory_space<vmem>>, vector<64x32xbf16>
    %cst_8 = arith.constant dense<0.000000e+00> : vector<16x32xf32>
    %16 = tpu.matmul %14, %15, %cst_8 {dimension_numbers = #tpu.dot_dimension_numbers<[1], [0], [0], [1], [0, 0, 1, 1], [], []>} : vector<16x64xbf16>, vector<64x32xbf16>, vector<16x32xf32> -> vector<16x32xf32>
    %17 = vector.broadcast %2 : vector<1x32xf32> to vector<16x32xf32>
    %18 = arith.addf %16, %17 : vector<16x32xf32>
    %cst_9 = arith.constant 0.000000e+00 : f32
    %19 = vector.broadcast %cst_9 : f32 to vector<16x32xf32>
    %20 = arith.maximumf %18, %19 : vector<16x32xf32>
    %21 = vector.shape_cast %20 : vector<16x32xf32> to vector<1x16x32xf32>
    %cst_10 = arith.constant dense<0xFF800000> : vector<1x32xf32>
    %22 = vector.multi_reduction <maximumf>, %21, %cst_10 [1] : vector<1x16x32xf32> to vector<1x32xf32>
    %23 = arith.truncf %22 : vector<1x32xf32> to vector<1x32xbf16>
    %c0_11 = arith.constant 0 : index
    %c0_12 = arith.constant 0 : index
    %24 = vector.load %arg6[%c0_11, %c0_12] : memref<32x64xbf16, #tpu.memory_space<vmem>>, vector<32x64xbf16>
    %cst_13 = arith.constant dense<0.000000e+00> : vector<1x64xf32>
    %25 = tpu.matmul %23, %24, %cst_13 {dimension_numbers = #tpu.dot_dimension_numbers<[1], [0], [0], [1], [0, 0, 1, 1], [], []>} : vector<1x32xbf16>, vector<32x64xbf16>, vector<1x64xf32> -> vector<1x64xf32>
    %26 = arith.addf %25, %3 : vector<1x64xf32>
    %27 = tpu.iota {dimensions = array<i32: 0>} : vector<8x1xi32>
    %28 = tpu.iota {dimensions = array<i32: 1>} : vector<8x1xi32>
    %c8_i32 = arith.constant 8 : i32
    %29 = vector.broadcast %c8_i32 : i32 to vector<8x1xi32>
    %30 = arith.muli %28, %29 : vector<8x1xi32>
    %31 = arith.cmpi sge, %27, %30 : vector<8x1xi32>
    %c1_i32 = arith.constant 1 : i32
    %32 = vector.broadcast %c1_i32 : i32 to vector<8x1xi32>
    %33 = arith.addi %28, %32 : vector<8x1xi32>
    %c8_i32_14 = arith.constant 8 : i32
    %34 = vector.broadcast %c8_i32_14 : i32 to vector<8x1xi32>
    %35 = arith.muli %33, %34 : vector<8x1xi32>
    %36 = arith.cmpi slt, %27, %35 : vector<8x1xi32>
    %37 = arith.andi %31, %36 : vector<8x1xi1>
    %38 = arith.extui %37 : vector<8x1xi1> to vector<8x1xi32>
    %39 = arith.sitofp %38 : vector<8x1xi32> to vector<8x1xf32>
    %40 = arith.truncf %39 : vector<8x1xf32> to vector<8x1xbf16>
    %41 = arith.truncf %26 : vector<1x64xf32> to vector<1x64xbf16>
    %cst_15 = arith.constant dense<0.000000e+00> : vector<8x64xf32>
    %42 = tpu.matmul %40, %41, %cst_15 {dimension_numbers = #tpu.dot_dimension_numbers<[1], [0], [0], [1], [0, 0, 1, 1], [], []>} : vector<8x1xbf16>, vector<1x64xbf16>, vector<8x64xf32> -> vector<8x64xf32>
    %c0_16 = arith.constant 0 : index
    %c0_17 = arith.constant 0 : index
    %43 = vector.load %arg2[%c0_16, %c0_17] : memref<8x16xf32, #tpu.memory_space<vmem>>, vector<8x16xf32>
    %44 = arith.truncf %43 : vector<8x16xf32> to vector<8x16xbf16>
    %c0_18 = arith.constant 0 : index
    %c0_19 = arith.constant 0 : index
    %45 = vector.load %arg7[%c0_18, %c0_19] : memref<16x64xbf16, #tpu.memory_space<vmem>>, vector<16x64xbf16>
    %cst_20 = arith.constant dense<0.000000e+00> : vector<8x64xf32>
    %46 = tpu.matmul %44, %45, %cst_20 {dimension_numbers = #tpu.dot_dimension_numbers<[1], [0], [0], [1], [0, 0, 1, 1], [], []>} : vector<8x16xbf16>, vector<16x64xbf16>, vector<8x64xf32> -> vector<8x64xf32>
    %47 = arith.addf %46, %42 : vector<8x64xf32>
    %cst_21 = arith.constant 0.000000e+00 : f32
    %48 = vector.broadcast %cst_21 : f32 to vector<8x64xf32>
    %49 = arith.maximumf %47, %48 : vector<8x64xf32>
    %50 = arith.truncf %49 : vector<8x64xf32> to vector<8x64xbf16>
    %c0_22 = arith.constant 0 : index
    %c0_23 = arith.constant 0 : index
    %51 = vector.load %arg8[%c0_22, %c0_23] : memref<64x64xbf16, #tpu.memory_space<vmem>>, vector<64x64xbf16>
    %cst_24 = arith.constant dense<0.000000e+00> : vector<8x64xf32>
    %52 = tpu.matmul %50, %51, %cst_24 {dimension_numbers = #tpu.dot_dimension_numbers<[1], [0], [0], [1], [0, 0, 1, 1], [], []>} : vector<8x64xbf16>, vector<64x64xbf16>, vector<8x64xf32> -> vector<8x64xf32>
    %53 = vector.broadcast %4 : vector<1x64xf32> to vector<8x64xf32>
    %54 = arith.addf %52, %53 : vector<8x64xf32>
    %cst_25 = arith.constant 0.000000e+00 : f32
    %55 = vector.broadcast %cst_25 : f32 to vector<8x64xf32>
    %56 = arith.maximumf %54, %55 : vector<8x64xf32>
    %57 = arith.truncf %56 : vector<8x64xf32> to vector<8x64xbf16>
    %c0_26 = arith.constant 0 : index
    %c0_27 = arith.constant 0 : index
    %58 = vector.load %arg9[%c0_26, %c0_27] : memref<64x128xbf16, #tpu.memory_space<vmem>>, vector<64x128xbf16>
    %cst_28 = arith.constant dense<0.000000e+00> : vector<8x128xf32>
    %59 = tpu.matmul %57, %58, %cst_28 {dimension_numbers = #tpu.dot_dimension_numbers<[1], [0], [0], [1], [0, 0, 1, 1], [], []>} : vector<8x64xbf16>, vector<64x128xbf16>, vector<8x128xf32> -> vector<8x128xf32>
    %60 = vector.broadcast %5 : vector<1x128xf32> to vector<8x128xf32>
    %61 = arith.addf %59, %60 : vector<8x128xf32>
    %c0_29 = arith.constant 0 : index
    %c0_30 = arith.constant 0 : index
    %62 = vector.load %arg3[%c0_29, %c0_30] : memref<8x1xf32, #tpu.memory_space<vmem>>, vector<8x1xf32>
    %63 = vector.broadcast %62 : vector<8x1xf32> to vector<8x128xf32>
    %64 = arith.mulf %61, %63 : vector<8x128xf32>
    %c0_31 = arith.constant 0 : index
    %c0_32 = arith.constant 0 : index
    %65 = vector.load %arg11[%c0_31, %c0_32] : memref<8x128xf32, #tpu.memory_space<vmem>>, vector<8x128xf32>
    tpu.vector_store %arg11[%c0_31, %c0_32], %64 {strides = array<i32>} : memref<8x128xf32, #tpu.memory_space<vmem>>, vector<8x128xf32>,
    return
  }
  func.func @transform_0(%arg0: i32) -> (i32, i32) {
    %c0_i32 = arith.constant 0 : i32
    %c0_i32_0 = arith.constant 0 : i32
    return %arg0, %c0_i32 : i32, i32
  }
  func.func @transform_1(%arg0: i32) -> (i32, i32) {
    %c0_i32 = arith.constant 0 : i32
    %c0_i32_0 = arith.constant 0 : i32
    return %arg0, %c0_i32 : i32, i32
  }
  func.func @transform_2(%arg0: i32) -> (i32, i32) {
    %c0_i32 = arith.constant 0 : i32
    %c0_i32_0 = arith.constant 0 : i32
    return %arg0, %c0_i32 : i32, i32
  }
  func.func @transform_3(%arg0: i32) -> (i32, i32) {
    %c0_i32 = arith.constant 0 : i32
    %c0_i32_0 = arith.constant 0 : i32
    %c0_i32_1 = arith.constant 0 : i32
    return %c0_i32, %c0_i32_0 : i32, i32
  }
  func.func @transform_4(%arg0: i32) -> (i32, i32) {
    %c0_i32 = arith.constant 0 : i32
    %c0_i32_0 = arith.constant 0 : i32
    %c0_i32_1 = arith.constant 0 : i32
    return %c0_i32, %c0_i32_0 : i32, i32
  }
  func.func @transform_5(%arg0: i32) -> (i32, i32) {
    %c0_i32 = arith.constant 0 : i32
    %c0_i32_0 = arith.constant 0 : i32
    %c0_i32_1 = arith.constant 0 : i32
    return %c0_i32, %c0_i32_0 : i32, i32
  }
  func.func @transform_6(%arg0: i32) -> (i32, i32) {
    %c0_i32 = arith.constant 0 : i32
    %c0_i32_0 = arith.constant 0 : i32
    %c0_i32_1 = arith.constant 0 : i32
    return %c0_i32, %c0_i32_0 : i32, i32
  }
  func.func @transform_7(%arg0: i32) -> (i32, i32) {
    %c0_i32 = arith.constant 0 : i32
    %c0_i32_0 = arith.constant 0 : i32
    %c0_i32_1 = arith.constant 0 : i32
    return %c0_i32, %c0_i32_0 : i32, i32
  }
  func.func @transform_8(%arg0: i32) -> (i32, i32) {
    %c0_i32 = arith.constant 0 : i32
    %c0_i32_0 = arith.constant 0 : i32
    %c0_i32_1 = arith.constant 0 : i32
    return %c0_i32, %c0_i32_0 : i32, i32
  }
  func.func @transform_9(%arg0: i32) -> (i32, i32) {
    %c0_i32 = arith.constant 0 : i32
    %c0_i32_0 = arith.constant 0 : i32
    %c0_i32_1 = arith.constant 0 : i32
    return %c0_i32, %c0_i32_0 : i32, i32
  }
  func.func @transform_10(%arg0: i32) -> (i32, i32) {
    %c0_i32 = arith.constant 0 : i32
    %c0_i32_0 = arith.constant 0 : i32
    return %arg0, %c0_i32 : i32, i32
  }
}

</mosaic_0001>

<llo_original>
// kernel: tpu_custom_call.1
$region0: #{tpu_custom_call.1}
  #allocation0 [shape = 'u32[]', space=smem, size = 0x4, offset = 0x4, fixed_abs, tag = 'smem constant byte address 0x4 - core index']
  #allocation1 [shape = 'u32[72,128]{1,0:T(1,128)}', space=vmem, size = 0x9000, scoped, tag = 'internal scratch']
  %s0 = inlined_call_operand.vmem [shape: f32[32,8], index: 0, kind: input, shape index: {}]
  %s1 = inlined_call_operand.vmem [shape: f32[16,16], index: 1, kind: input, shape index: {}]
  %s2 = inlined_call_operand.vmem [shape: f32[16,1], index: 2, kind: input, shape index: {}]
  %s3 = inlined_call_operand.hbm [shape: bf16[8,64], index: 3, kind: input, shape index: {}]
  %s4 = inlined_call_operand.vmem [shape: bf16[64,32], index: 4, kind: input, shape index: {}]
  %s5 = inlined_call_operand.hbm [shape: bf16[32,64], index: 5, kind: input, shape index: {}]
  %s6 = inlined_call_operand.hbm [shape: bf16[16,64], index: 6, kind: input, shape index: {}]
  %s7 = inlined_call_operand.vmem [shape: bf16[64,64], index: 7, kind: input, shape index: {}]
  %s8 = inlined_call_operand.vmem [shape: bf16[64,128], index: 8, kind: input, shape index: {}]
  %s9 = inlined_call_operand.hbm [shape: f32[8,128], index: 9, kind: input, shape index: {}]
  %s10 = inlined_call_operand.hbm [shape: f32[16,128], index: 10, kind: output, shape index: {}]
  %s11 = sld [smem:[#allocation0]]
  $region89: #{tpu_custom_call.1} parent=0
    _
  %s13 = ssub.s32 1, %s11
  %s14 = scalar_select 0, %s13, %s11
  $region1: #{tpu_custom_call.1} parent=0
    #allocation2 [shape = 'u8[2048]{0}', space=vmem, size = 0x800, scoped, tag = 'input window, operand 3, single buffered']
    #allocation3 [shape = 's32[2]{0}', space=sflag, size = 0x8, scoped, tag = 'scoped memory for tpu_custom_call.1']
    #allocation4 [shape = 's32[2]{0}', space=sflag, size = 0x8, scoped, tag = 'scoped memory for tpu_custom_call.1']
    #allocation5 [shape = 'u8[8192]{0}', space=vmem, size = 0x2000, scoped, tag = 'input window, operand 5, single buffered']
    #allocation6 [shape = 's32[1]{0}', space=sflag, size = 0x4, scoped, tag = 'scoped memory for tpu_custom_call.1']
    #allocation7 [shape = 'u8[4096]{0}', space=vmem, size = 0x1000, scoped, tag = 'input window, operand 6, single buffered']
    #allocation8 [shape = 'u8[4096]{0}', space=vmem, size = 0x1000, scoped, tag = 'input window, operand 9, single buffered']
    #allocation9 [shape = 's32[1]{0}', space=sflag, size = 0x4, scoped, tag = 'scoped memory for tpu_custom_call.1']
    #allocation10 [shape = 'u8[8192]{0}', space=vmem, size = 0x2000, scoped, tag = 'output window, operand 0']
    %15 = vsyncpa [#allocation3], 0
    %16 = vsyncpa [#allocation6], 0
    %17 = vsyncpa [#allocation9], 0
    %18 = vsyncpa [#allocation4], 0
    %s19 = scalar_lea.sflag [#allocation4], 1
    %20 = vsyncpa %s19, 0
    loop: start=0, step=1, limit=4
    $region2: #{tpu_custom_call.1} parent=1 // loop_pre_header
      _
    $region3: #{tpu_custom_call.1} parent=1 // loop_header
      %s22 = sphi 0, %s26
      %p23 = scmp.ge.s32.totalorder %s22, 4
      %s32 = sphi 0, %s34
      %s35 = sphi 0, %s32
      %s36 = sphi 0, %s35
      %s52 = sphi 0, %s36
      %s58 = sphi 0, %s60
      %s61 = sphi 0, %s58
      %s62 = sphi 0, %s61
      %s78 = sphi 0, %s62
      %s84 = sphi 0, %s86
      %s87 = sphi 0, %s84
      %s88 = sphi 0, %s87
      %s104 = sphi 0, %s88
      %s108 = sphi 0, %s108
      %s110 = sphi 0, %s108
      %s111 = sphi 0, %s110
      %s125 = sphi 0, %s111
      %s129 = sphi 0, %s129
      %s131 = sphi 0, %s129
      %s132 = sphi 0, %s131
      %s146 = sphi 0, %s132
      %s150 = sphi 0, %s150
      %s152 = sphi 0, %s150
      %s153 = sphi 0, %s152
      %s167 = sphi 0, %s153
      %s171 = sphi 0, %s171
      %s173 = sphi 0, %s171
      %s174 = sphi 0, %s173
      %s188 = sphi 0, %s174
      %s192 = sphi 0, %s192
      %s194 = sphi 0, %s192
      %s195 = sphi 0, %s194
      %s209 = sphi 0, %s195
      %s213 = sphi 0, %s213
      %s215 = sphi 0, %s213
      %s216 = sphi 0, %s215
      %s230 = sphi 0, %s216
      %s234 = sphi 0, %s234
      %s236 = sphi 0, %s234
      %s237 = sphi 0, %s236
      %s251 = sphi 0, %s237
      %s257 = sphi 0, %s259
      %s260 = sphi 0, %s257
      %s261 = sphi 0, %s260
      %s277 = sphi 0, %s261
    $region4: #{tpu_custom_call.1} parent=1 // loop_header_branch
      %25 = sbr.rel (%p23) target = $region8
    $region5: #{tpu_custom_call.1} parent=1 // loop_body
      %s27 = ssub.s32 %s22, 1
      %s28 = ssub.s32 %s22, 2
      %s29 = sadd.s32 %s22, 1
      %s30 = ssub.s32 %s22, %s29
      %p31 = scmp.eq.s32.totalorder %s30, 0
      %s33 = sadd.s32 %s32, 1
      %s34 = scalar_select %p31, %s32, %s33
      %p37 = pneg %p31
      %p38 = scmp.eq.s32.totalorder %s22, 1
      %p39 = por %p37, %p38
      %p40 = scmp.ne.s32.totalorder %s32, %s35
      %p41 = scmp.eq.s32.totalorder %s22, 0
      %p42 = por %p40, %p41
      %p43 = scmp.ne.s32.totalorder %s32, %s35
      %p44 = scmp.eq.s32.totalorder %s27, 1
      %p45 = por %p43, %p44
      %p46 = scmp.ne.s32.totalorder %s35, %s36
      %p47 = scmp.eq.s32.totalorder %s27, 0
      %p48 = por %p46, %p47
      %p49 = scmp.ne.s32.totalorder %s35, %s36
      %p50 = scmp.eq.s32.totalorder %s28, 1
      %p51 = por %p49, %p50
      %p53 = scmp.ne.s32.totalorder %s36, %s52
      %p54 = scmp.eq.s32.totalorder %s28, 0
      %p55 = por %p53, %p54
      %s56 = ssub.s32 %s22, %s29
      %p57 = scmp.eq.s32.totalorder %s56, 0
      %s59 = sadd.s32 %s58, 1
      %s60 = scalar_select %p57, %s58, %s59
      %p63 = pneg %p57
      %p64 = scmp.eq.s32.totalorder %s22, 1
      %p65 = por %p63, %p64
      %p66 = scmp.ne.s32.totalorder %s58, %s61
      %p67 = scmp.eq.s32.totalorder %s22, 0
      %p68 = por %p66, %p67
      %p69 = scmp.ne.s32.totalorder %s58, %s61
      %p70 = scmp.eq.s32.totalorder %s27, 1
      %p71 = por %p69, %p70
      %p72 = scmp.ne.s32.totalorder %s61, %s62
      %p73 = scmp.eq.s32.totalorder %s27, 0
      %p74 = por %p72, %p73
      %p75 = scmp.ne.s32.totalorder %s61, %s62
      %p76 = scmp.eq.s32.totalorder %s28, 1
      %p77 = por %p75, %p76
      %p79 = scmp.ne.s32.totalorder %s62, %s78
      %p80 = scmp.eq.s32.totalorder %s28, 0
      %p81 = por %p79, %p80
      %s82 = ssub.s32 %s22, %s29
      %p83 = scmp.eq.s32.totalorder %s82, 0
      %s85 = sadd.s32 %s84, 1
      %s86 = scalar_select %p83, %s84, %s85
      %p89 = pneg %p83
      %p90 = scmp.eq.s32.totalorder %s22, 1
      %p91 = por %p89, %p90
      %p92 = scmp.ne.s32.totalorder %s84, %s87
      %p93 = scmp.eq.s32.totalorder %s22, 0
      %p94 = por %p92, %p93
      %p95 = scmp.ne.s32.totalorder %s84, %s87
      %p96 = scmp.eq.s32.totalorder %s27, 1
      %p97 = por %p95, %p96
      %p98 = scmp.ne.s32.totalorder %s87, %s88
      %p99 = scmp.eq.s32.totalorder %s27, 0
      %p100 = por %p98, %p99
      %p101 = scmp.ne.s32.totalorder %s87, %s88
      %p102 = scmp.eq.s32.totalorder %s28, 1
      %p103 = por %p101, %p102
      %p105 = scmp.ne.s32.totalorder %s88, %s104
      %p106 = scmp.eq.s32.totalorder %s28, 0
      %p107 = por %p105, %p106
      %s109 = sadd.s32 %s108, 1
      %p112 = scmp.eq.s32.totalorder %s22, 1
      %p113 = scmp.ne.s32.totalorder %s108, %s110
      %p114 = scmp.eq.s32.totalorder %s22, 0
      %p115 = por %p113, %p114
      %p116 = scmp.ne.s32.totalorder %s108, %s110
      %p117 = scmp.eq.s32.totalorder %s27, 1
      %p118 = por %p116, %p117
      %p119 = scmp.ne.s32.totalorder %s110, %s111
      %p120 = scmp.eq.s32.totalorder %s27, 0
      %p121 = por %p119, %p120
      %p122 = scmp.ne.s32.totalorder %s110, %s111
      %p123 = scmp.eq.s32.totalorder %s28, 1
      %p124 = por %p122, %p123
      %p126 = scmp.ne.s32.totalorder %s111, %s125
      %p127 = scmp.eq.s32.totalorder %s28, 0
      %p128 = por %p126, %p127
      %s130 = sadd.s32 %s129, 1
      %p133 = scmp.eq.s32.totalorder %s22, 1
      %p134 = scmp.ne.s32.totalorder %s129, %s131
      %p135 = scmp.eq.s32.totalorder %s22, 0
      %p136 = por %p134, %p135
      %p137 = scmp.ne.s32.totalorder %s129, %s131
      %p138 = scmp.eq.s32.totalorder %s27, 1
      %p139 = por %p137, %p138
      %p140 = scmp.ne.s32.totalorder %s131, %s132
      %p141 = scmp.eq.s32.totalorder %s27, 0
      %p142 = por %p140, %p141
      %p143 = scmp.ne.s32.totalorder %s131, %s132
      %p144 = scmp.eq.s32.totalorder %s28, 1
      %p145 = por %p143, %p144
      %p147 = scmp.ne.s32.totalorder %s132, %s146
      %p148 = scmp.eq.s32.totalorder %s28, 0
      %p149 = por %p147, %p148
      %s151 = sadd.s32 %s150, 1
      %p154 = scmp.eq.s32.totalorder %s22, 1
      %p155 = scmp.ne.s32.totalorder %s150, %s152
      %p156 = scmp.eq.s32.totalorder %s22, 0
      %p157 = por %p155, %p156
      %p158 = scmp.ne.s32.totalorder %s150, %s152
      %p159 = scmp.eq.s32.totalorder %s27, 1
      %p160 = por %p158, %p159
      %p161 = scmp.ne.s32.totalorder %s152, %s153
      %p162 = scmp.eq.s32.totalorder %s27, 0
      %p163 = por %p161, %p162
      %p164 = scmp.ne.s32.totalorder %s152, %s153
      %p165 = scmp.eq.s32.totalorder %s28, 1
      %p166 = por %p164, %p165
      %p168 = scmp.ne.s32.totalorder %s153, %s167
      %p169 = scmp.eq.s32.totalorder %s28, 0
      %p170 = por %p168, %p169
      %s172 = sadd.s32 %s171, 1
      %p175 = scmp.eq.s32.totalorder %s22, 1
      %p176 = scmp.ne.s32.totalorder %s171, %s173
      %p177 = scmp.eq.s32.totalorder %s22, 0
      %p178 = por %p176, %p177
      %p179 = scmp.ne.s32.totalorder %s171, %s173
      %p180 = scmp.eq.s32.totalorder %s27, 1
      %p181 = por %p179, %p180
      %p182 = scmp.ne.s32.totalorder %s173, %s174
      %p183 = scmp.eq.s32.totalorder %s27, 0
      %p184 = por %p182, %p183
      %p185 = scmp.ne.s32.totalorder %s173, %s174
      %p186 = scmp.eq.s32.totalorder %s28, 1
      %p187 = por %p185, %p186
      %p189 = scmp.ne.s32.totalorder %s174, %s188
      %p190 = scmp.eq.s32.totalorder %s28, 0
      %p191 = por %p189, %p190
      %s193 = sadd.s32 %s192, 1
      %p196 = scmp.eq.s32.totalorder %s22, 1
      %p197 = scmp.ne.s32.totalorder %s192, %s194
      %p198 = scmp.eq.s32.totalorder %s22, 0
      %p199 = por %p197, %p198
      %p200 = scmp.ne.s32.totalorder %s192, %s194
      %p201 = scmp.eq.s32.totalorder %s27, 1
      %p202 = por %p200, %p201
      %p203 = scmp.ne.s32.totalorder %s194, %s195
      %p204 = scmp.eq.s32.totalorder %s27, 0
      %p205 = por %p203, %p204
      %p206 = scmp.ne.s32.totalorder %s194, %s195
      %p207 = scmp.eq.s32.totalorder %s28, 1
      %p208 = por %p206, %p207
      %p210 = scmp.ne.s32.totalorder %s195, %s209
      %p211 = scmp.eq.s32.totalorder %s28, 0
      %p212 = por %p210, %p211
      %s214 = sadd.s32 %s213, 1
      %p217 = scmp.eq.s32.totalorder %s22, 1
      %p218 = scmp.ne.s32.totalorder %s213, %s215
      %p219 = scmp.eq.s32.totalorder %s22, 0
      %p220 = por %p218, %p219
      %p221 = scmp.ne.s32.totalorder %s213, %s215
      %p222 = scmp.eq.s32.totalorder %s27, 1
      %p223 = por %p221, %p222
      %p224 = scmp.ne.s32.totalorder %s215, %s216
      %p225 = scmp.eq.s32.totalorder %s27, 0
      %p226 = por %p224, %p225
      %p227 = scmp.ne.s32.totalorder %s215, %s216
      %p228 = scmp.eq.s32.totalorder %s28, 1
      %p229 = por %p227, %p228
      %p231 = scmp.ne.s32.totalorder %s216, %s230
      %p232 = scmp.eq.s32.totalorder %s28, 0
      %p233 = por %p231, %p232
      %s235 = sadd.s32 %s234, 1
      %p238 = scmp.eq.s32.totalorder %s22, 1
      %p239 = scmp.ne.s32.totalorder %s234, %s236
      %p240 = scmp.eq.s32.totalorder %s22, 0
      %p241 = por %p239, %p240
      %p242 = scmp.ne.s32.totalorder %s234, %s236
      %p243 = scmp.eq.s32.totalorder %s27, 1
      %p244 = por %p242, %p243
      %p245 = scmp.ne.s32.totalorder %s236, %s237
      %p246 = scmp.eq.s32.totalorder %s27, 0
      %p247 = por %p245, %p246
      %p248 = scmp.ne.s32.totalorder %s236, %s237
      %p249 = scmp.eq.s32.totalorder %s28, 1
      %p250 = por %p248, %p249
      %p252 = scmp.ne.s32.totalorder %s237, %s251
      %p253 = scmp.eq.s32.totalorder %s28, 0
      %p254 = por %p252, %p253
      %s255 = ssub.s32 %s22, %s29
      %p256 = scmp.eq.s32.totalorder %s255, 0
      %s258 = sadd.s32 %s257, 1
      %s259 = scalar_select %p256, %s257, %s258
      %p262 = pneg %p256
      %p263 = scmp.eq.s32.totalorder %s22, 1
      %p264 = por %p262, %p263
      %p265 = scmp.ne.s32.totalorder %s257, %s260
      %p266 = scmp.eq.s32.totalorder %s22, 0
      %p267 = por %p265, %p266
      %p268 = scmp.ne.s32.totalorder %s257, %s260
      %p269 = scmp.eq.s32.totalorder %s27, 1
      %p270 = por %p268, %p269
      %p271 = scmp.ne.s32.totalorder %s260, %s261
      %p272 = scmp.eq.s32.totalorder %s27, 0
      %p273 = por %p271, %p272
      %p274 = scmp.ne.s32.totalorder %s260, %s261
      %p275 = scmp.eq.s32.totalorder %s28, 1
      %p276 = por %p274, %p275
      %p278 = scmp.ne.s32.totalorder %s261, %s277
      %p279 = scmp.eq.s32.totalorder %s28, 0
      %p280 = por %p278, %p279
      %p281 = scmp.le.s32.totalorder 1, %s22
      %p282 = scmp.lt.s32.totalorder %s22, 3
      %p283 = pnand %p281, %p282
      %p284 = pneg %p283
      // Predicated region
      $region9: #{tpu_custom_call.1} parent=5 // pred_check
        _
      $region10: #{tpu_custom_call.1} parent=5 // pred_check_branch
        %286 = sbr.rel (%p283) target = $region12
      $region11: #{tpu_custom_call.1} parent=5 // pred_region
        %s287 = ssub.s32 %s22, 1
        // Predicated region
        $region13: #{tpu_custom_call.1} parent=11 // pred_check
          %p288 = pneg %p121
        $region14: #{tpu_custom_call.1} parent=11 // pred_check_branch
          %290 = sbr.rel (%p288) target = $region16
        $region15: #{tpu_custom_call.1} parent=11 // pred_region
          %292 = vsyncadd [#allocation3], 0
          %s294 = sshll.u32 %s3, 4
          %s295 = int_to_ptr.hbm [resolvable:$true] %s294
          %s296 = sshll.u32 [#allocation2], 4
          %s297 = int_to_ptr.vmem [resolvable:$true] %s296
          %299 = dma.hbm_to_vmem [thread:$0]  %s295, 64, %s297, [#allocation3]
        $region16: #{tpu_custom_call.1} parent=11 // pred_fallthru
          _
        // Predicated region
        $region17: #{tpu_custom_call.1} parent=11 // pred_check
          %p300 = pneg %p142
        $region18: #{tpu_custom_call.1} parent=11 // pred_check_branch
          %302 = sbr.rel (%p300) target = $region20
        $region19: #{tpu_custom_call.1} parent=11 // pred_region
          _
        $region20: #{tpu_custom_call.1} parent=11 // pred_fallthru
          _
        // Predicated region
        $region21: #{tpu_custom_call.1} parent=11 // pred_check
          %p303 = pneg %p163
        $region22: #{tpu_custom_call.1} parent=11 // pred_check_branch
          %305 = sbr.rel (%p303) target = $region24
        $region23: #{tpu_custom_call.1} parent=11 // pred_region
          %307 = vsyncadd [#allocation6], 0
          %s308 = sshll.u32 %s5, 4
          %s309 = int_to_ptr.hbm [resolvable:$true] %s308
          %s310 = sshll.u32 [#allocation5], 4
          %s311 = int_to_ptr.vmem [resolvable:$true] %s310
          %316 = dma.hbm_to_vmem [thread:$0]  %s309, 256, %s311, [#allocation6], 64, 64, 4
        $region24: #{tpu_custom_call.1} parent=11 // pred_fallthru
          _
        // Predicated region
        $region25: #{tpu_custom_call.1} parent=11 // pred_check
          %p317 = pneg %p184
        $region26: #{tpu_custom_call.1} parent=11 // pred_check_branch
          %319 = sbr.rel (%p317) target = $region28
        $region27: #{tpu_custom_call.1} parent=11 // pred_region
          %321 = vsyncadd [#allocation6], 0
          %s322 = sshll.u32 %s6, 4
          %s323 = int_to_ptr.hbm [resolvable:$true] %s322
          %s324 = sshll.u32 [#allocation7], 4
          %s325 = int_to_ptr.vmem [resolvable:$true] %s324
          %330 = dma.hbm_to_vmem [thread:$0]  %s323, 128, %s325, [#allocation6], 64, 64, 4
        $region28: #{tpu_custom_call.1} parent=11 // pred_fallthru
          _
        // Predicated region
        $region29: #{tpu_custom_call.1} parent=11 // pred_check
          %p331 = pneg %p205
        $region30: #{tpu_custom_call.1} parent=11 // pred_check_branch
          %333 = sbr.rel (%p331) target = $region32
        $region31: #{tpu_custom_call.1} parent=11 // pred_region
          _
        $region32: #{tpu_custom_call.1} parent=11 // pred_fallthru
          _
        // Predicated region
        $region33: #{tpu_custom_call.1} parent=11 // pred_check
          %p334 = pneg %p226
        $region34: #{tpu_custom_call.1} parent=11 // pred_check_branch
          %336 = sbr.rel (%p334) target = $region36
        $region35: #{tpu_custom_call.1} parent=11 // pred_region
          _
        $region36: #{tpu_custom_call.1} parent=11 // pred_fallthru
          _
        // Predicated region
        $region37: #{tpu_custom_call.1} parent=11 // pred_check
          %p337 = pneg %p247
        $region38: #{tpu_custom_call.1} parent=11 // pred_check_branch
          %339 = sbr.rel (%p337) target = $region40
        $region39: #{tpu_custom_call.1} parent=11 // pred_region
          %341 = vsyncadd [#allocation9], 0
          %s343 = sshll.u32 %s9, 4
          %s344 = int_to_ptr.hbm [resolvable:$true] %s343
          %s345 = sshll.u32 [#allocation8], 4
          %s346 = int_to_ptr.vmem [resolvable:$true] %s345
          %348 = dma.hbm_to_vmem [thread:$0]  %s344, 128, %s346, [#allocation9]
        $region40: #{tpu_custom_call.1} parent=11 // pred_fallthru
          _
      $region12: #{tpu_custom_call.1} parent=5 // pred_fallthru
        _
      %p349 = scmp.lt.s32.totalorder %s22, 2
      // Predicated region
      $region41: #{tpu_custom_call.1} parent=5 // pred_check
        %p350 = pneg %p349
      $region42: #{tpu_custom_call.1} parent=5 // pred_check_branch
        %352 = sbr.rel (%p350) target = $region44
      $region43: #{tpu_custom_call.1} parent=5 // pred_region
        // Predicated region
        $region45: #{tpu_custom_call.1} parent=43 // pred_check
          %p353 = pneg %p42
        $region46: #{tpu_custom_call.1} parent=43 // pred_check_branch
          %355 = sbr.rel (%p353) target = $region48
        $region47: #{tpu_custom_call.1} parent=43 // pred_region
          %s356 = smul.u32 2, %s22
          %p357 = scmp.lt.s32.totalorder %s356, 3
          %s358 = scalar_select %p357, %s356, 3
          %s359 = smul.addr %s358, 8
          %s360 = scalar_lea.vmem %s0, %s359
          %s361 = smul.u32 2, %s22
        $region48: #{tpu_custom_call.1} parent=43 // pred_fallthru
          _
        // Predicated region
        $region49: #{tpu_custom_call.1} parent=43 // pred_check
          %p362 = pneg %p68
        $region50: #{tpu_custom_call.1} parent=43 // pred_check_branch
          %364 = sbr.rel (%p362) target = $region52
        $region51: #{tpu_custom_call.1} parent=43 // pred_region
          %p365 = scmp.lt.s32.totalorder %s22, 1
          %s366 = scalar_select %p365, %s22, 1
          %s367 = smul.addr %s366, 8
          %s368 = scalar_lea.vmem %s1, %s367
        $region52: #{tpu_custom_call.1} parent=43 // pred_fallthru
          _
        // Predicated region
        $region53: #{tpu_custom_call.1} parent=43 // pred_check
          %p369 = pneg %p94
        $region54: #{tpu_custom_call.1} parent=43 // pred_check_branch
          %371 = sbr.rel (%p369) target = $region56
        $region55: #{tpu_custom_call.1} parent=43 // pred_region
          %p372 = scmp.lt.s32.totalorder %s22, 1
          %s373 = scalar_select %p372, %s22, 1
          %s374 = smul.addr %s373, 8
          %s375 = scalar_lea.vmem %s2, %s374
        $region56: #{tpu_custom_call.1} parent=43 // pred_fallthru
          _
      $region44: #{tpu_custom_call.1} parent=5 // pred_fallthru
        _
      %p376 = scmp.le.s32.totalorder 1, %s22
      %p377 = scmp.lt.s32.totalorder %s22, 3
      %p378 = pnand %p376, %p377
      %p379 = pneg %p378
      // Predicated region
      $region57: #{tpu_custom_call.1} parent=5 // pred_check
        _
      $region58: #{tpu_custom_call.1} parent=5 // pred_check_branch
        %381 = sbr.rel (%p378) target = $region60
      $region59: #{tpu_custom_call.1} parent=5 // pred_region
        %s382 = ssub.s32 %s22, 1
        // Predicated region
        $region61: #{tpu_custom_call.1} parent=59 // pred_check
          %p383 = pneg %p121
        $region62: #{tpu_custom_call.1} parent=59 // pred_check_branch
          %385 = sbr.rel (%p383) target = $region64
        $region63: #{tpu_custom_call.1} parent=59 // pred_region
          %387 = dma.done [#allocation3], 64
        $region64: #{tpu_custom_call.1} parent=59 // pred_fallthru
          _
        // Predicated region
        $region65: #{tpu_custom_call.1} parent=59 // pred_check
          %p388 = pneg %p163
        $region66: #{tpu_custom_call.1} parent=59 // pred_check_branch
          %390 = sbr.rel (%p388) target = $region68
        $region67: #{tpu_custom_call.1} parent=59 // pred_region
          %392 = dma.done [#allocation6], 256
        $region68: #{tpu_custom_call.1} parent=59 // pred_fallthru
          _
        // Predicated region
        $region69: #{tpu_custom_call.1} parent=59 // pred_check
          %p393 = pneg %p184
        $region70: #{tpu_custom_call.1} parent=59 // pred_check_branch
          %395 = sbr.rel (%p393) target = $region72
        $region71: #{tpu_custom_call.1} parent=59 // pred_region
          %397 = dma.done [#allocation6], 128
        $region72: #{tpu_custom_call.1} parent=59 // pred_fallthru
          _
        // Predicated region
        $region73: #{tpu_custom_call.1} parent=59 // pred_check
          %p398 = pneg %p247
        $region74: #{tpu_custom_call.1} parent=59 // pred_check_branch
          %400 = sbr.rel (%p398) target = $region76
        $region75: #{tpu_custom_call.1} parent=59 // pred_region
          %402 = dma.done [#allocation9], 128
        $region76: #{tpu_custom_call.1} parent=59 // pred_fallthru
          _
        %s403 = smul.u32 2, %s27
        %p404 = scmp.lt.s32.totalorder %s403, 3
        %s405 = scalar_select %p404, %s403, 3
        %s406 = smul.addr %s405, 8
        %s407 = scalar_lea.vmem %s0, %s406
        %p408 = pneg %p48
        %p409 = pneg %p45
        %p410 = scmp.lt.s32.totalorder %s27, 1
        %s411 = scalar_select %p410, %s27, 1
        %s412 = smul.addr %s411, 8
        %s413 = scalar_lea.vmem %s1, %s412
        %p414 = pneg %p74
        %p415 = pneg %p71
        %p416 = scmp.lt.s32.totalorder %s27, 1
        %s417 = scalar_select %p416, %s27, 1
        %s418 = smul.addr %s417, 8
        %s419 = scalar_lea.vmem %s2, %s418
        %p420 = pneg %p100
        %p421 = pneg %p97
        %p422 = pneg %p121
        %p423 = pneg %p118
        %p424 = pneg %p142
        %p425 = pneg %p139
        %p426 = pneg %p163
        %p427 = pneg %p160
        %p428 = pneg %p184
        %p429 = pneg %p181
        %p430 = pneg %p205
        %p431 = pneg %p202
        %p432 = pneg %p226
        %p433 = pneg %p223
        %p434 = pneg %p247
        %p435 = pneg %p244
        %p436 = pneg %p273
        %p437 = pneg %p270
        %s438 = sand.u32 %s260, 1
        %s439 = scalar_lea.sflag [#allocation4], %s438
        %s440 = sand.u32 %s260, 1
        %s441 = smul.addr %s440, 8
        %s442 = scalar_lea.vmem [#allocation10], %s441
        %s443 = smul.u32 2, %s27
        %p444 = scmp.lt.s32.totalorder %s443, 3
        %s445 = scalar_select %p444, %s443, 3
        %s446 = smul.addr %s445, 8
        %s447 = scalar_lea.vmem %s0, %s446
        %s448 = smul.u32 2, %s27
        %p449 = scmp.lt.s32.totalorder %s27, 1
        %s450 = scalar_select %p449, %s27, 1
        %s451 = smul.addr %s450, 8
        %s452 = scalar_lea.vmem %s1, %s451
        %p453 = scmp.lt.s32.totalorder %s27, 1
        %s454 = scalar_select %p453, %s27, 1
        %s455 = smul.addr %s454, 8
        %s456 = scalar_lea.vmem %s2, %s455
        %v458 = vld [vmem:[#allocation8] sm:$0xff]
        %v459 = vld [vmem:[%s447] sm:$0xff]
        %v460 = vld [vmem:[%s447 + $0x8] sm:$0xff]
        %v461 = vpack.c.bf16 %v460, %v459
        %v462 = vld [vmem:[#allocation2] sm:$0xf]
        %v463 = vperm.slane %v458, 0
        %vm464 = vcmask 64512
        %v466 = vsel %vm464, %v461, 0
        %vm468 = vcmask 1043456
        %v470 = vsel %vm468, %v462, 0
        %472 = vmatpush.bf16.msra.mxu0 0
        %473 = vmatpush.bf16.msra.mxu0 0
        %474 = vmatpush.bf16.msra.mxu0 0
        %475 = vmatpush.bf16.msra.mxu0 0
        %476 = vmatpush.bf16.msra.mxu0 0
        %477 = vmatpush.bf16.msra.mxu0 0
        %478 = vmatpush.bf16.msra.mxu0 0
        %479 = vmatpush.bf16.msra.mxu0 %v470
        %480 = vmatmul.bf16.gmra.mxu0 %v466
        %v481 = vpop.f32.mrf.mxu0
        %v482 = vadd.f32 %v463, %v481
        %v483 = vpop.f32.mrf.mxu0
        %v484 = vadd.f32 %v463, %v483
        %485 = vdwg.mxu0
        %v486 = vmax.f32 %v482, 0.0
        %v487 = vmax.f32 %v484, 0.0
        %v488 = vpack.c.bf16 %v487, %v486
        %v489 = vld [vmem:[%s4] sm:$0xf]
        %v490 = vld [vmem:[%s4 + $0x4] sm:$0xf]
        %v491 = vld [vmem:[%s4 + $0x8] sm:$0xf]
        %v492 = vld [vmem:[%s4 + $0xc] sm:$0xf]
        %v493 = vld [vmem:[%s4 + $0x10] sm:$0xf]
        %v494 = vld [vmem:[%s4 + $0x14] sm:$0xf]
        %v495 = vld [vmem:[%s4 + $0x18] sm:$0xf]
        %v496 = vld [vmem:[%s4 + $0x1c] sm:$0xf]
        %v497 = vperm.slane %v458, 1
        %v506 = vunpack.c.l.b16 %v489
        %v507 = vunpack.c.l.b16 %v490
        %v508 = vunpack.c.l.b16 %v491
        %v509 = vunpack.c.l.b16 %v492
        %v510 = vunpack.c.l.b16 %v493
        %v511 = vunpack.c.l.b16 %v494
        %v512 = vunpack.c.l.b16 %v495
        %v513 = vunpack.c.l.b16 %v496
        %v514 = vpack.c.b16 %v507, %v506
        %v515 = vpack.c.b16 %v509, %v508
        %v516 = vpack.c.b16 %v511, %v510
        %v517 = vpack.c.b16 %v513, %v512
        %vm522 = vcmask 523264
        %v524 = vsel %vm522, %v488, 0
        %526 = vmatpush.bf16.msra.mxu0 0
        %527 = vmatpush.bf16.msra.mxu0 0
        %528 = vmatpush.bf16.msra.mxu0 0
        %529 = vmatpush.bf16.msra.mxu0 0
        %530 = vmatpush.bf16.msra.mxu0 %v517
        %531 = vmatpush.bf16.msra.mxu0 %v516
        %532 = vmatpush.bf16.msra.mxu0 %v515
        %533 = vmatpush.bf16.msra.mxu0 %v514
        %534 = vmatmul.bf16.gmra.mxu0 %v524
        %v535 = vpop.f32.mrf.mxu0
        %v536 = vadd.f32 %v497, %v535
        %v537 = vpop.f32.mrf.mxu0
        %v538 = vadd.f32 %v497, %v537
        %539 = vdwg.mxu0
        %v540 = vmax.f32 %v536, 0.0
        %v541 = vmax.f32 %v538, 0.0
        %vm542 = vcmask 261120
        %v543 = vsel %vm542, %v540, -inf
        %v544 = vsel %vm542, %v541, -inf
        %v545 = vmax.f32 %v543, %v544
        %v546 = vrot.slane %v545, 4
        %v547 = vmax.f32 %v545, %v546
        %v548 = vrot.slane %v547, 2
        %v549 = vmax.f32 %v547, %v548
        %v550 = vrot.slane %v549, 1
        %v551 = vmax.f32 %v549, %v550
        %v552 = vpack.c.bf16 %v551, %v551
        %v553 = vld [vmem:[#allocation5] sm:$0xf]
        %v554 = vld [vmem:[#allocation5 + $0x4] sm:$0xf]
        %v555 = vld [vmem:[#allocation5 + $0x8] sm:$0xf]
        %v556 = vld [vmem:[#allocation5 + $0xc] sm:$0xf]
        %v561 = vunpack.c.l.b16 %v553
        %v562 = vunpack.c.l.b16 %v554
        %v563 = vunpack.c.l.b16 %v555
        %v564 = vunpack.c.l.b16 %v556
        %v565 = vpack.c.b16 %v562, %v561
        %v566 = vpack.c.b16 %v564, %v563
        %v570 = vrot.slane %v458, 2
        %v573 = vsel %vm542, %v552, 0
        %575 = vmatpush.bf16.msra.mxu0 0
        %576 = vmatpush.bf16.msra.mxu0 0
        %577 = vmatpush.bf16.msra.mxu0 0
        %578 = vmatpush.bf16.msra.mxu0 0
        %579 = vmatpush.bf16.msra.mxu0 0
        %580 = vmatpush.bf16.msra.mxu0 0
        %581 = vmatpush.bf16.msra.mxu0 %v566
        %582 = vmatpush.bf16.msra.mxu0 %v565
        %583 = vmatmul.bf16.gmra.mxu0 %v573
        %v584 = vpop.f32.mrf.mxu0
        %v585 = vadd.f32 %v570, %v584
        %v586 = vpop.f32.mrf.mxu0
        %587 = vdwg.mxu0
        %v588 = vlaneseq
        %v589 = vshrl.u32 %v588, 7
        %v590 = vlaneseq
        %v591 = vand.u32 %v590, 127
        %v592 = vmul.u32 %v591, 8
        %vm593 = vcmp.ge.s32.totalorder %v589, %v592
        %v594 = vadd.s32 %v591, 1
        %v595 = vmul.u32 %v594, 8
        %vm596 = vcmp.lt.s32.totalorder %v589, %v595
        %vm597 = vmand %vm593, %vm596
        %v598 = vsel %vm597, 1, 0
        %v599 = vcvt.s32.f32 %v598
        %v600 = vpack.c.bf16 %v599, %v599
        %v601 = vpack.c.bf16 %v585, %v585
        %vm602 = vcmask 7168
        %v604 = vsel %vm602, %v600, 0
        %vm606 = vcmask 1040384
        %v607 = vsel 0, 4294967295, 65535
        %v608 = vsel %vm606, %v607, 0
        %v610 = vand.u32 %v601, %v608
        %612 = vmatpush.bf16.msra.mxu0 0
        %613 = vmatpush.bf16.msra.mxu0 0
        %614 = vmatpush.bf16.msra.mxu0 0
        %615 = vmatpush.bf16.msra.mxu0 0
        %616 = vmatpush.bf16.msra.mxu0 0
        %617 = vmatpush.bf16.msra.mxu0 0
        %618 = vmatpush.bf16.msra.mxu0 0
        %619 = vmatpush.bf16.msra.mxu0 %v610
        %620 = vmatmul.bf16.gmra.mxu0 %v604
        %v621 = vpop.f32.mrf.mxu0
        %v622 = vadd.f32 0.0, %v621
        %v623 = vpop.f32.mrf.mxu0
        %624 = vdwg.mxu0
        %v625 = vld [vmem:[%s452] sm:$0xff]
        %v626 = vpack.c.bf16 %v625, %v625
        %v627 = vld [vmem:[#allocation7] sm:$0xf]
        %v628 = vld [vmem:[#allocation7 + $0x4] sm:$0xf]
        %v631 = vunpack.c.l.b16 %v627
        %v632 = vunpack.c.l.b16 %v628
        %v633 = vpack.c.b16 %v632, %v631
        %vm635 = vcmask 130048
        %v637 = vsel %vm635, %v626, 0
        %639 = vmatpush.bf16.msra.mxu0 0
        %640 = vmatpush.bf16.msra.mxu0 0
        %641 = vmatpush.bf16.msra.mxu0 0
        %642 = vmatpush.bf16.msra.mxu0 0
        %643 = vmatpush.bf16.msra.mxu0 0
        %644 = vmatpush.bf16.msra.mxu0 0
        %645 = vmatpush.bf16.msra.mxu0 0
        %646 = vmatpush.bf16.msra.mxu0 %v633
        %647 = vmatmul.bf16.gmra.mxu0 %v637
        %v648 = vpop.f32.mrf.mxu0
        %v649 = vadd.f32 %v622, %v648
        %v650 = vpop.f32.mrf.mxu0
        %651 = vdwg.mxu0
        %v652 = vmax.f32 %v649, 0.0
        %v653 = vpack.c.bf16 %v652, %v652
        %v654 = vld [vmem:[%s7] sm:$0xf]
        %v655 = vld [vmem:[%s7 + $0x4] sm:$0xf]
        %v656 = vld [vmem:[%s7 + $0x8] sm:$0xf]
        %v657 = vld [vmem:[%s7 + $0xc] sm:$0xf]
        %v658 = vld [vmem:[%s7 + $0x10] sm:$0xf]
        %v659 = vld [vmem:[%s7 + $0x14] sm:$0xf]
        %v660 = vld [vmem:[%s7 + $0x18] sm:$0xf]
        %v661 = vld [vmem:[%s7 + $0x1c] sm:$0xf]
        %v662 = vperm.slane %v458, 3
        %v671 = vunpack.c.l.b16 %v654
        %v672 = vunpack.c.l.b16 %v655
        %v673 = vunpack.c.l.b16 %v656
        %v674 = vunpack.c.l.b16 %v657
        %v675 = vunpack.c.l.b16 %v658
        %v676 = vunpack.c.l.b16 %v659
        %v677 = vunpack.c.l.b16 %v660
        %v678 = vunpack.c.l.b16 %v661
        %v679 = vpack.c.b16 %v672, %v671
        %v680 = vpack.c.b16 %v674, %v673
        %v681 = vpack.c.b16 %v676, %v675
        %v682 = vpack.c.b16 %v678, %v677
        %v688 = vsel %vm522, %v653, 0
        %690 = vmatpush.bf16.msra.mxu0 0
        %691 = vmatpush.bf16.msra.mxu0 0
        %692 = vmatpush.bf16.msra.mxu0 0
        %693 = vmatpush.bf16.msra.mxu0 0
        %694 = vmatpush.bf16.msra.mxu0 %v682
        %695 = vmatpush.bf16.msra.mxu0 %v681
        %696 = vmatpush.bf16.msra.mxu0 %v680
        %697 = vmatpush.bf16.msra.mxu0 %v679
        %698 = vmatmul.bf16.gmra.mxu0 %v688
        %v699 = vpop.f32.mrf.mxu0
        %v700 = vadd.f32 %v662, %v699
        %v701 = vpop.f32.mrf.mxu0
        %702 = vdwg.mxu0
        %v703 = vmax.f32 %v700, 0.0
        %v704 = vpack.c.bf16 %v703, %v703
        %v705 = vld [vmem:[%s8] sm:$0xf]
        %v706 = vld [vmem:[%s8 + $0x4] sm:$0xf]
        %v707 = vld [vmem:[%s8 + $0x8] sm:$0xf]
        %v708 = vld [vmem:[%s8 + $0xc] sm:$0xf]
        %v709 = vld [vmem:[%s8 + $0x10] sm:$0xf]
        %v710 = vld [vmem:[%s8 + $0x14] sm:$0xf]
        %v711 = vld [vmem:[%s8 + $0x18] sm:$0xf]
        %v712 = vld [vmem:[%s8 + $0x1c] sm:$0xf]
        %v713 = vperm.slane %v458, 4
        %v722 = vunpack.c.l.b16 %v705
        %v723 = vunpack.c.l.b16 %v706
        %v724 = vunpack.c.l.b16 %v707
        %v725 = vunpack.c.l.b16 %v708
        %v726 = vunpack.c.l.b16 %v709
        %v727 = vunpack.c.l.b16 %v710
        %v728 = vunpack.c.l.b16 %v711
        %v729 = vunpack.c.l.b16 %v712
        %v730 = vpack.c.b16 %v723, %v722
        %v731 = vpack.c.b16 %v725, %v724
        %v732 = vpack.c.b16 %v727, %v726
        %v733 = vpack.c.b16 %v729, %v728
        %v739 = vsel %vm522, %v704, 0
        %741 = vmatpush.bf16.msra.mxu0 0
        %742 = vmatpush.bf16.msra.mxu0 0
        %743 = vmatpush.bf16.msra.mxu0 0
        %744 = vmatpush.bf16.msra.mxu0 0
        %745 = vmatpush.bf16.msra.mxu0 %v733
        %746 = vmatpush.bf16.msra.mxu0 %v732
        %747 = vmatpush.bf16.msra.mxu0 %v731
        %748 = vmatpush.bf16.msra.mxu0 %v730
        %749 = vmatmul.bf16.gmra.mxu0 %v739
        %v750 = vpop.f32.mrf.mxu0
        %v751 = vadd.f32 %v713, %v750
        %v752 = vpop.f32.mrf.mxu0
        %753 = vdwg.mxu0
        %v754 = vld [vmem:[%s456] sm:$0xff]
        %756 = vset.pattern.permute.xlu0 0
        %757 = vperm.xlu0 %756, %v754
        %v758 = vpop.permute.xlu0 %757
        %v760 = vmul.f32 %v751, %v758
        %761 = vst [vmem:[%s442] sm:$0xff] %v760
        %s762 = sand.u32 %s260, 1
        %s763 = scalar_lea.sflag [#allocation4], %s762
        %s764 = sand.u32 %s260, 1
        %s765 = smul.addr %s764, 8
        %s766 = scalar_lea.vmem [#allocation10], %s765
        // Predicated region
        $region77: #{tpu_custom_call.1} parent=59 // pred_check
          %p767 = pneg %p270
        $region78: #{tpu_custom_call.1} parent=59 // pred_check_branch
          %769 = sbr.rel (%p767) target = $region80
        $region79: #{tpu_custom_call.1} parent=59 // pred_region
          %771 = vsyncadd %s763, 0
          %s772 = smul.addr %s27, 8
          %s773 = scalar_lea.hbm %s10, %s772
          %s775 = sshll.u32 %s766, 4
          %s776 = int_to_ptr.vmem [resolvable:$true] %s775
          %s777 = sshll.u32 %s773, 4
          %s778 = int_to_ptr.hbm [resolvable:$true] %s777
          %780 = dma.vmem_to_hbm [thread:$0]  %s776, 128, %s778, %s763
        $region80: #{tpu_custom_call.1} parent=59 // pred_fallthru
          _
      $region60: #{tpu_custom_call.1} parent=5 // pred_fallthru
        _
      %p781 = scmp.le.s32.totalorder 2, %s22
      // Predicated region
      $region81: #{tpu_custom_call.1} parent=5 // pred_check
        %p782 = pneg %p781
      $region82: #{tpu_custom_call.1} parent=5 // pred_check_branch
        %784 = sbr.rel (%p782) target = $region84
      $region83: #{tpu_custom_call.1} parent=5 // pred_region
        %s785 = ssub.s32 %s22, 2
        // Predicated region
        $region85: #{tpu_custom_call.1} parent=83 // pred_check
          %p786 = pneg %p276
        $region86: #{tpu_custom_call.1} parent=83 // pred_check_branch
          %788 = sbr.rel (%p786) target = $region88
        $region87: #{tpu_custom_call.1} parent=83 // pred_region
          %s789 = sand.u32 %s261, 1
          %s790 = scalar_lea.sflag [#allocation4], %s789
          %s791 = sand.u32 %s261, 1
          %s792 = smul.addr %s791, 8
          %s793 = scalar_lea.vmem [#allocation10], %s792
          %795 = dma.done %s790, 128
        $region88: #{tpu_custom_call.1} parent=83 // pred_fallthru
          _
      $region84: #{tpu_custom_call.1} parent=5 // pred_fallthru
        _
    $region6: #{tpu_custom_call.1} parent=1 // loop_footer
      %s26 = sadd.s32 1, %s22
    $region7: #{tpu_custom_call.1} parent=1 // loop_footer_branch
      %21 = sbr.rel target = $region3
    $region8: #{tpu_custom_call.1} parent=1 // loop_exit
      _
    %796 = vsyncpa [#allocation3], 1
    %s797 = scalar_lea.sflag [#allocation3], 1
    %798 = vsyncpa %s797, 1
    %799 = vsyncpa [#allocation6], 1
    %800 = vsyncpa [#allocation9], 1
    %801 = vsyncpa [#allocation4], 1
    %s802 = scalar_lea.sflag [#allocation4], 1
    %803 = vsyncpa %s802, 1

</llo_original>
